<compile_context>
chip_gen: v6e
topology: v6e:2x2x1
jax: 0.10.0
libtpu: 0.0.40
codegen_flags: <defaults>
</compile_context>

<pallas_src>
import functools

import jax
import jax.numpy as jnp
from jax.experimental import pallas as pl
from jax.experimental.pallas import tpu as pltpu

N_PAD = 128  # lane-dense padded output width


def net_kernel(x_ref, y_ref, w_ref, b_ref, o_ref):
    # x_ref/y_ref: (B, K) f32   w_ref: (K, N_PAD) f32   b_ref: (1, N_PAD) f32
    # o_ref: (B, N_PAD) f32
    z = jnp.sin(x_ref[...]) + jnp.cos(y_ref[...])              # VPU/EUP, (B, K)
    # Linear: z @ W_pad + b_pad  — single MXU pass, bias add rides the VALU slack
    o_ref[...] = (
        jnp.dot(z, w_ref[...], preferred_element_type=jnp.float32)
        + b_ref[...]
    )


def prepare_params(w, b):
    """One-time parameter prep (hoisted out of the per-call path).

    Returns the weight pre-transposed to (K, N_PAD) and the bias padded to
    (1, N_PAD), both lane-dense f32 device arrays.
    """
    n_out, k = w.shape
    w_pad = jnp.zeros((k, N_PAD), dtype=jnp.float32).at[:, :n_out].set(w.T)
    b_pad = jnp.zeros((1, N_PAD), dtype=jnp.float32).at[0, :n_out].set(b)
    return w_pad, b_pad


@functools.partial(jax.jit, static_argnames=("n_out",))
def net_forward(x, y, w_pad, b_pad, n_out=10):
    B, K = x.shape

    out_pad = pl.pallas_call(
        net_kernel,
        out_shape=jax.ShapeDtypeStruct((B, N_PAD), jnp.float32),
        in_specs=[
            pl.BlockSpec(memory_space=pltpu.MemorySpace.VMEM),   # x
            pl.BlockSpec(memory_space=pltpu.MemorySpace.VMEM),   # y
            pl.BlockSpec(memory_space=pltpu.MemorySpace.VMEM),   # w_pad
            pl.BlockSpec(memory_space=pltpu.MemorySpace.VMEM),   # b_pad
        ],
        out_specs=pl.BlockSpec(memory_space=pltpu.MemorySpace.VMEM),
        cost_estimate=pl.CostEstimate(
            flops=2 * B * K * N_PAD + B * N_PAD,        # padded matmul + bias
            transcendentals=2 * B * K,                  # sin + cos
            bytes_accessed=(2 * B * K + K * N_PAD + N_PAD + B * N_PAD) * 4,
        ),
    )(x, y, w_pad, b_pad)

    # Only the [:, :n_out] slice remains outside the kernel (dropped entirely
    # if a consumer can accept the padded (B, 128) slab).
    return out_pad[:, :n_out]


if __name__ == "__main__":
    key = jax.random.PRNGKey(0)
    kx, ky = jax.random.split(key)

    # Shapes implied by the module: x, y : (32, 64)
    x = jax.random.normal(kx, (32, 64), dtype=jnp.float32)
    y = jax.random.normal(ky, (32, 64), dtype=jnp.float32)

    # Deterministic parameters, exactly as in Net.__init__
    w = jnp.arange(640, dtype=jnp.float32).reshape(10, 64)   # (out=10, in=64)
    b = jnp.zeros((10,), dtype=jnp.float32)

    # One-time parameter prep (not part of the per-call path).
    w_pad, b_pad = jax.block_until_ready(prepare_params(w, b))

    out = net_forward(x, y, w_pad, b_pad, n_out=10)
    jax.block_until_ready(out)

    # Pure-JAX reference check
    ref = (jnp.sin(x) + jnp.cos(y)) @ w.T + b
    assert out.shape == (32, 10)
    assert jnp.allclose(out, ref, atol=1e-4, rtol=1e-4)

    print("KERNEL_OK")
</pallas_src>

<mosaic_0001>
module attributes {stable_mosaic.version = 11 : i64} {
  func.func @net_kernel(%arg0: memref<32x64xf32, #tpu.memory_space<vmem>>, %arg1: memref<32x64xf32, #tpu.memory_space<vmem>>, %arg2: memref<64x128xf32, #tpu.memory_space<vmem>>, %arg3: memref<1x128xf32, #tpu.memory_space<vmem>>, %arg4: memref<32x128xf32, #tpu.memory_space<vmem>>) attributes {dimension_semantics = [], scalar_prefetch = 0 : i64, scratch_operands = 0 : i64, tpu.core_type = #tpu.core_type<tc>} {
    %c0 = arith.constant 0 : index
    %c0_0 = arith.constant 0 : index
    %0 = vector.load %arg0[%c0, %c0_0] : memref<32x64xf32, #tpu.memory_space<vmem>>, vector<32x64xf32>
    %1 = math.sin %0 : vector<32x64xf32>
    %c0_1 = arith.constant 0 : index
    %c0_2 = arith.constant 0 : index
    %2 = vector.load %arg1[%c0_1, %c0_2] : memref<32x64xf32, #tpu.memory_space<vmem>>, vector<32x64xf32>
    %3 = math.cos %2 : vector<32x64xf32>
    %4 = arith.addf %1, %3 : vector<32x64xf32>
    %c0_3 = arith.constant 0 : index
    %c0_4 = arith.constant 0 : index
    %5 = vector.load %arg2[%c0_3, %c0_4] : memref<64x128xf32, #tpu.memory_space<vmem>>, vector<64x128xf32>
    %cst = arith.constant dense<0.000000e+00> : vector<32x128xf32>
    %6 = tpu.matmul %4, %5, %cst {dimension_numbers = #tpu.dot_dimension_numbers<[1], [0], [0], [1], [0, 0, 1, 1], [], []>} : vector<32x64xf32>, vector<64x128xf32>, vector<32x128xf32> -> vector<32x128xf32>
    %c0_5 = arith.constant 0 : index
    %c0_6 = arith.constant 0 : index
    %7 = vector.load %arg3[%c0_5, %c0_6] : memref<1x128xf32, #tpu.memory_space<vmem>>, vector<1x128xf32>
    %8 = vector.broadcast %7 : vector<1x128xf32> to vector<32x128xf32>
    %9 = arith.addf %6, %8 : vector<32x128xf32>
    %c0_7 = arith.constant 0 : index
    %c0_8 = arith.constant 0 : index
    %10 = vector.load %arg4[%c0_7, %c0_8] : memref<32x128xf32, #tpu.memory_space<vmem>>, vector<32x128xf32>
    tpu.vector_store %arg4[%c0_7, %c0_8], %9 {strides = array<i32>} : memref<32x128xf32, #tpu.memory_space<vmem>>, vector<32x128xf32>,
    return
  }
}

</mosaic_0001>

<llo_original>
// kernel: net_forward.1
$region0: #{net_forward.1}
  #allocation0 [shape = 'u32[]', space=smem, size = 0x4, offset = 0x4, fixed_abs, tag = 'smem constant byte address 0x4 - core index']
  #allocation1 [shape = 'u32[144,128]{1,0:T(1,128)}', space=vmem, size = 0x12000, scoped, tag = 'internal scratch']
  %s0 = inlined_call_operand.hbm [shape: f32[32,64], index: 0, kind: input, shape index: {}]
  %s1 = inlined_call_operand.hbm [shape: f32[32,64], index: 1, kind: input, shape index: {}]
  %s2 = inlined_call_operand.hbm [shape: f32[64,128], index: 2, kind: input, shape index: {}]
  %s3 = inlined_call_operand.vmem [shape: f32[1,128], index: 3, kind: input, shape index: {}]
  %s4 = inlined_call_operand.vmem [shape: f32[32,128], index: 4, kind: output, shape index: {}]
  %s5 = sld [smem:[#allocation0]]
  $region38: #{net_forward.1} parent=0
    _
  %s7 = ssub.s32 1, %s5
  %s8 = scalar_select 0, %s7, %s5
  $region1: #{net_forward.1} parent=0
    #allocation2 [shape = 'u8[16384]{0}', space=vmem, size = 0x4000, scoped, tag = 'input window, operand 0, single buffered']
    #allocation3 [shape = 's32[1]{0}', space=sflag, size = 0x4, scoped, tag = 'scoped memory for net_forward.1']
    #allocation4 [shape = 'u8[16384]{0}', space=vmem, size = 0x4000, scoped, tag = 'input window, operand 1, single buffered']
    #allocation5 [shape = 's32[1]{0}', space=sflag, size = 0x4, scoped, tag = 'scoped memory for net_forward.1']
    #allocation6 [shape = 'u8[32768]{0}', space=vmem, size = 0x8000, scoped, tag = 'input window, operand 2, single buffered']
    %9 = vsyncpa [#allocation3], 0
    %10 = vsyncpa [#allocation5], 0
    // Predicated region
    $region2: #{net_forward.1} parent=1 // pred_check
      _
    $region3: #{net_forward.1} parent=1 // pred_check_branch
      %12 = sbr.rel (0) target = $region5
    $region4: #{net_forward.1} parent=1 // pred_region
      %s14 = ssub.s32 512, 512
      %15 = vsyncadd [#allocation3], %s14
      %s16 = sshll.u32 [#allocation2], 4
      %s17 = int_to_ptr.vmem [resolvable:$true] %s16
      %22 = dma.hbm_to_vmem [thread:$0]  %s0, 512, %s17, [#allocation3], 128, 128, 8
    $region5: #{net_forward.1} parent=1 // pred_fallthru
      _
    // Predicated region
    $region6: #{net_forward.1} parent=1 // pred_check
      _
    $region7: #{net_forward.1} parent=1 // pred_check_branch
      %24 = sbr.rel (0) target = $region9
    $region8: #{net_forward.1} parent=1 // pred_region
      %s26 = ssub.s32 512, 512
      %27 = vsyncadd [#allocation5], %s26
      %s28 = sshll.u32 [#allocation4], 4
      %s29 = int_to_ptr.vmem [resolvable:$true] %s28
      %34 = dma.hbm_to_vmem [thread:$0]  %s1, 512, %s29, [#allocation5], 128, 128, 8
    $region9: #{net_forward.1} parent=1 // pred_fallthru
      _
    // Predicated region
    $region10: #{net_forward.1} parent=1 // pred_check
      _
    $region11: #{net_forward.1} parent=1 // pred_check_branch
      %36 = sbr.rel (0) target = $region13
    $region12: #{net_forward.1} parent=1 // pred_region
      %s38 = ssub.s32 1024, 1024
      %39 = vsyncadd [#allocation5], %s38
      %s40 = sshll.u32 [#allocation6], 4
      %s41 = int_to_ptr.vmem [resolvable:$true] %s40
      %46 = dma.hbm_to_vmem [thread:$0]  %s2, 1024, %s41, [#allocation5], 128, 128, 8
    $region13: #{net_forward.1} parent=1 // pred_fallthru
      _
    // Predicated region
    $region14: #{net_forward.1} parent=1 // pred_check
      _
    $region15: #{net_forward.1} parent=1 // pred_check_branch
      %48 = sbr.rel (0) target = $region17
    $region16: #{net_forward.1} parent=1 // pred_region
      _
    $region17: #{net_forward.1} parent=1 // pred_fallthru
      _
    // Predicated region
    $region18: #{net_forward.1} parent=1 // pred_check
      _
    $region19: #{net_forward.1} parent=1 // pred_check_branch
      %50 = sbr.rel (0) target = $region21
    $region20: #{net_forward.1} parent=1 // pred_region
      %51 = dma.done [#allocation3], 512
    $region21: #{net_forward.1} parent=1 // pred_fallthru
      _
    // Predicated region
    $region22: #{net_forward.1} parent=1 // pred_check
      _
    $region23: #{net_forward.1} parent=1 // pred_check_branch
      %53 = sbr.rel (0) target = $region25
    $region24: #{net_forward.1} parent=1 // pred_region
      %54 = dma.done [#allocation5], 512
    $region25: #{net_forward.1} parent=1 // pred_fallthru
      _
    // Predicated region
    $region26: #{net_forward.1} parent=1 // pred_check
      _
    $region27: #{net_forward.1} parent=1 // pred_check_branch
      %56 = sbr.rel (0) target = $region29
    $region28: #{net_forward.1} parent=1 // pred_region
      %57 = dma.done [#allocation5], 1024
    $region29: #{net_forward.1} parent=1 // pred_fallthru
      _
    %v58 = vld [vmem:[#allocation2] sm:$0xff]
    %v59 = vld [vmem:[#allocation2 + $0x8] sm:$0xff]
    %v60 = vld [vmem:[#allocation2 + $0x10] sm:$0xff]
    %v61 = vld [vmem:[#allocation2 + $0x18] sm:$0xff]
    %v62 = vand.u32 2147483647, %v58
    %vm63 = vcmp.le.f32.partialorder %v62, 0.7853982
    %vm64 = vcmp.lt.s32.totalorder %v58, 0
    %v65 = vand.u32 %v58, 2139095040
    %v66 = vshrl.u32 %v65, 23
    %v67 = vsub.s32 %v66, 127
    %v68 = vand.u32 2147483647, %v58
    %v69 = vand.u32 %v68, 8388607
    %v70 = vor.u32 %v69, 8388608
    %v71 = vsub.s32 0, %v70
    %v72 = vadd.s32 %v67, 1
    %vm73 = vcmp.gt.s32.totalorder %v72, 0
    %v74 = vsel %vm73, %v72, 0
    %v75 = vshrl.u32 %v74, 5
    %v76 = vand.u32 %v74, 31
    %v77 = vsub.s32 32, %v76
    %v78 = vshrl.u32 683565275, %v77
    %v79 = vshll.u32 683565275, %v76
    %v80 = vshrl.u32 2475754826, %v77
    %v81 = vor.u32 %v79, %v80
    %v82 = vshll.u32 2475754826, %v76
    %v83 = vshrl.u32 2131351028, %v77
    %v84 = vor.u32 %v82, %v83
    %v85 = vshll.u32 2131351028, %v76
    %v86 = vshrl.u32 2102212464, %v77
    %v87 = vor.u32 %v85, %v86
    %v88 = vshll.u32 2102212464, %v76
    %v89 = vshrl.u32 920167782, %v77
    %v90 = vor.u32 %v88, %v89
    %v91 = vshll.u32 920167782, %v76
    %v92 = vshrl.u32 1326507024, %v77
    %v93 = vor.u32 %v91, %v92
    %vm94 = vcmp.lt.s32.totalorder %v75, 1
    %vm95 = vcmp.lt.s32.totalorder %v75, 2
    %vm96 = vcmp.lt.s32.totalorder %v75, 3
    %vm97 = vcmp.lt.s32.totalorder %v75, 4
    %v98 = vsel %vm94, %v78, %v81
    %v99 = vsel %vm97, %v87, 2102212464
    %v100 = vsel %vm96, %v84, %v99
    %v101 = vsel %vm95, %v98, %v100
    %v102 = vsel %vm94, %v81, %v84
    %v103 = vsel %vm97, %v90, 920167782
    %v104 = vsel %vm96, %v87, %v103
    %v105 = vsel %vm95, %v102, %v104
    %v106 = vsel %vm94, %v84, %v87
    %v107 = vsel %vm97, %v93, 1326507024
    %v108 = vsel %vm96, %v90, %v107
    %v109 = vsel %vm95, %v106, %v108
    %v110 = vshll.u32 %v70, 8
    %v111 = vmul.u32.u64.compose %v110, %v109
    %v112 = vextract.low.u32 %v111
    %v113 = vextract.high.u32 %v111
    %v114 = vmul.u32.u64.compose %v110, %v105
    %v115 = vextract.low.u32 %v114
    %v116 = vextract.high.u32 %v114
    %v117 = vmul.u32 %v110, %v101
    %v118 = vadd.s32 %v113, %v115
    %vm119 = vc.u32 %v113, %v115
    %v120 = vadd.s32 %v116, 1
    %v121 = vsel %vm119, %v120, %v116
    %v122 = vadd.s32 %v117, %v121
    %v123 = vadd.s32 %v122, 536870912
    %v124 = vshrl.u32 %v123, 30
    %v125 = vshll.u32 %v124, 30
    %v126 = vsub.s32 %v122, %v125
    %vm127 = vcmp.lt.s32.totalorder %v126, 0
    %v128 = vsub.s32 0, %v126
    %v129 = vsel %vm127, %v128, %v126
    %v130 = vclz %v129
    %v131 = vsub.s32 %v130, 2
    %vm132 = vcmp.gt.s32.totalorder 0, %v131
    %v133 = vsel %vm132, 0, %v131
    %v134 = vsub.s32 32, %v133
    %v135 = vshll.u32 %v126, %v133
    %v136 = vshrl.u32 %v118, %v134
    %v137 = vor.u32 %v135, %v136
    %v138 = vsub.s32 4294967266, %v133
    %v139 = vadd.s32 %v138, 127
    %v140 = vshll.u32 %v139, 23
    %v141 = vor.u32 4788187, %v140
    %v142 = vand.u32 2147483647, %v141
    %v144 = vcvt.s32.f32 %v137
    %v145 = vmul.f32 %v144, %v142
    %v146 = vxor.u32 %v145, 2147483648
    %v147 = vsel %vm64, %v146, %v145
    %v148 = vsub.s32 4, %v124
    %v149 = vsel %vm64, %v148, %v124
    %v150 = vsel %vm63, %v58, %v147
    %v151 = vsel %vm63, 0, %v149
    %v152 = vcosq.f32.pop %v150
    %v153 = vsinq.f32.pop %v150
    %vm154 = vweird.f32 %v58
    %v155 = vadd.s32 %v151, 3
    %v156 = vand.u32 %v155, 3
    %vm157 = vcmp.lt.s32.totalorder %v156, 2
    %vm158 = vcmp.eq.s32.totalorder %v156, 0
    %v159 = vxor.u32 %v153, 2147483648
    %v160 = vsel %vm158, %v152, %v159
    %vm161 = vcmp.eq.s32.totalorder %v156, 2
    %v162 = vxor.u32 %v152, 2147483648
    %v163 = vsel %vm161, %v162, %v153
    %v164 = vsel %vm157, %v160, %v163
    %v165 = vsel %vm154, nan, %v164
    %v166 = vand.u32 2147483647, %v59
    %vm167 = vcmp.le.f32.partialorder %v166, 0.7853982
    %vm168 = vcmp.lt.s32.totalorder %v59, 0
    %v169 = vand.u32 %v59, 2139095040
    %v170 = vshrl.u32 %v169, 23
    %v171 = vsub.s32 %v170, 127
    %v172 = vand.u32 2147483647, %v59
    %v173 = vand.u32 %v172, 8388607
    %v174 = vor.u32 %v173, 8388608
    %v175 = vsub.s32 0, %v174
    %v176 = vadd.s32 %v171, 1
    %vm177 = vcmp.gt.s32.totalorder %v176, 0
    %v178 = vsel %vm177, %v176, 0
    %v179 = vshrl.u32 %v178, 5
    %v180 = vand.u32 %v178, 31
    %v181 = vsub.s32 32, %v180
    %v182 = vshrl.u32 683565275, %v181
    %v183 = vshll.u32 683565275, %v180
    %v184 = vshrl.u32 2475754826, %v181
    %v185 = vor.u32 %v183, %v184
    %v186 = vshll.u32 2475754826, %v180
    %v187 = vshrl.u32 2131351028, %v181
    %v188 = vor.u32 %v186, %v187
    %v189 = vshll.u32 2131351028, %v180
    %v190 = vshrl.u32 2102212464, %v181
    %v191 = vor.u32 %v189, %v190
    %v192 = vshll.u32 2102212464, %v180
    %v193 = vshrl.u32 920167782, %v181
    %v194 = vor.u32 %v192, %v193
    %v195 = vshll.u32 920167782, %v180
    %v196 = vshrl.u32 1326507024, %v181
    %v197 = vor.u32 %v195, %v196
    %vm198 = vcmp.lt.s32.totalorder %v179, 1
    %vm199 = vcmp.lt.s32.totalorder %v179, 2
    %vm200 = vcmp.lt.s32.totalorder %v179, 3
    %vm201 = vcmp.lt.s32.totalorder %v179, 4
    %v202 = vsel %vm198, %v182, %v185
    %v203 = vsel %vm201, %v191, 2102212464
    %v204 = vsel %vm200, %v188, %v203
    %v205 = vsel %vm199, %v202, %v204
    %v206 = vsel %vm198, %v185, %v188
    %v207 = vsel %vm201, %v194, 920167782
    %v208 = vsel %vm200, %v191, %v207
    %v209 = vsel %vm199, %v206, %v208
    %v210 = vsel %vm198, %v188, %v191
    %v211 = vsel %vm201, %v197, 1326507024
    %v212 = vsel %vm200, %v194, %v211
    %v213 = vsel %vm199, %v210, %v212
    %v214 = vshll.u32 %v174, 8
    %v215 = vmul.u32.u64.compose %v214, %v213
    %v216 = vextract.low.u32 %v215
    %v217 = vextract.high.u32 %v215
    %v218 = vmul.u32.u64.compose %v214, %v209
    %v219 = vextract.low.u32 %v218
    %v220 = vextract.high.u32 %v218
    %v221 = vmul.u32 %v214, %v205
    %v222 = vadd.s32 %v217, %v219
    %vm223 = vc.u32 %v217, %v219
    %v224 = vadd.s32 %v220, 1
    %v225 = vsel %vm223, %v224, %v220
    %v226 = vadd.s32 %v221, %v225
    %v227 = vadd.s32 %v226, 536870912
    %v228 = vshrl.u32 %v227, 30
    %v229 = vshll.u32 %v228, 30
    %v230 = vsub.s32 %v226, %v229
    %vm231 = vcmp.lt.s32.totalorder %v230, 0
    %v232 = vsub.s32 0, %v230
    %v233 = vsel %vm231, %v232, %v230
    %v234 = vclz %v233
    %v235 = vsub.s32 %v234, 2
    %vm236 = vcmp.gt.s32.totalorder 0, %v235
    %v237 = vsel %vm236, 0, %v235
    %v238 = vsub.s32 32, %v237
    %v239 = vshll.u32 %v230, %v237
    %v240 = vshrl.u32 %v222, %v238
    %v241 = vor.u32 %v239, %v240
    %v242 = vsub.s32 4294967266, %v237
    %v243 = vadd.s32 %v242, 127
    %v244 = vshll.u32 %v243, 23
    %v245 = vor.u32 4788187, %v244
    %v246 = vand.u32 2147483647, %v245
    %v248 = vcvt.s32.f32 %v241
    %v249 = vmul.f32 %v248, %v246
    %v250 = vxor.u32 %v249, 2147483648
    %v251 = vsel %vm168, %v250, %v249
    %v252 = vsub.s32 4, %v228
    %v253 = vsel %vm168, %v252, %v228
    %v254 = vsel %vm167, %v59, %v251
    %v255 = vsel %vm167, 0, %v253
    %v256 = vcosq.f32.pop %v254
    %v257 = vsinq.f32.pop %v254
    %vm258 = vweird.f32 %v59
    %v259 = vadd.s32 %v255, 3
    %v260 = vand.u32 %v259, 3
    %vm261 = vcmp.lt.s32.totalorder %v260, 2
    %vm262 = vcmp.eq.s32.totalorder %v260, 0
    %v263 = vxor.u32 %v257, 2147483648
    %v264 = vsel %vm262, %v256, %v263
    %vm265 = vcmp.eq.s32.totalorder %v260, 2
    %v266 = vxor.u32 %v256, 2147483648
    %v267 = vsel %vm265, %v266, %v257
    %v268 = vsel %vm261, %v264, %v267
    %v269 = vsel %vm258, nan, %v268
    %v270 = vand.u32 2147483647, %v60
    %vm271 = vcmp.le.f32.partialorder %v270, 0.7853982
    %vm272 = vcmp.lt.s32.totalorder %v60, 0
    %v273 = vand.u32 %v60, 2139095040
    %v274 = vshrl.u32 %v273, 23
    %v275 = vsub.s32 %v274, 127
    %v276 = vand.u32 2147483647, %v60
    %v277 = vand.u32 %v276, 8388607
    %v278 = vor.u32 %v277, 8388608
    %v279 = vsub.s32 0, %v278
    %v280 = vadd.s32 %v275, 1
    %vm281 = vcmp.gt.s32.totalorder %v280, 0
    %v282 = vsel %vm281, %v280, 0
    %v283 = vshrl.u32 %v282, 5
    %v284 = vand.u32 %v282, 31
    %v285 = vsub.s32 32, %v284
    %v286 = vshrl.u32 683565275, %v285
    %v287 = vshll.u32 683565275, %v284
    %v288 = vshrl.u32 2475754826, %v285
    %v289 = vor.u32 %v287, %v288
    %v290 = vshll.u32 2475754826, %v284
    %v291 = vshrl.u32 2131351028, %v285
    %v292 = vor.u32 %v290, %v291
    %v293 = vshll.u32 2131351028, %v284
    %v294 = vshrl.u32 2102212464, %v285
    %v295 = vor.u32 %v293, %v294
    %v296 = vshll.u32 2102212464, %v284
    %v297 = vshrl.u32 920167782, %v285
    %v298 = vor.u32 %v296, %v297
    %v299 = vshll.u32 920167782, %v284
    %v300 = vshrl.u32 1326507024, %v285
    %v301 = vor.u32 %v299, %v300
    %vm302 = vcmp.lt.s32.totalorder %v283, 1
    %vm303 = vcmp.lt.s32.totalorder %v283, 2
    %vm304 = vcmp.lt.s32.totalorder %v283, 3
    %vm305 = vcmp.lt.s32.totalorder %v283, 4
    %v306 = vsel %vm302, %v286, %v289
    %v307 = vsel %vm305, %v295, 2102212464
    %v308 = vsel %vm304, %v292, %v307
    %v309 = vsel %vm303, %v306, %v308
    %v310 = vsel %vm302, %v289, %v292
    %v311 = vsel %vm305, %v298, 920167782
    %v312 = vsel %vm304, %v295, %v311
    %v313 = vsel %vm303, %v310, %v312
    %v314 = vsel %vm302, %v292, %v295
    %v315 = vsel %vm305, %v301, 1326507024
    %v316 = vsel %vm304, %v298, %v315
    %v317 = vsel %vm303, %v314, %v316
    %v318 = vshll.u32 %v278, 8
    %v319 = vmul.u32.u64.compose %v318, %v317
    %v320 = vextract.low.u32 %v319
    %v321 = vextract.high.u32 %v319
    %v322 = vmul.u32.u64.compose %v318, %v313
    %v323 = vextract.low.u32 %v322
    %v324 = vextract.high.u32 %v322
    %v325 = vmul.u32 %v318, %v309
    %v326 = vadd.s32 %v321, %v323
    %vm327 = vc.u32 %v321, %v323
    %v328 = vadd.s32 %v324, 1
    %v329 = vsel %vm327, %v328, %v324
    %v330 = vadd.s32 %v325, %v329
    %v331 = vadd.s32 %v330, 536870912
    %v332 = vshrl.u32 %v331, 30
    %v333 = vshll.u32 %v332, 30
    %v334 = vsub.s32 %v330, %v333
    %vm335 = vcmp.lt.s32.totalorder %v334, 0
    %v336 = vsub.s32 0, %v334
    %v337 = vsel %vm335, %v336, %v334
    %v338 = vclz %v337
    %v339 = vsub.s32 %v338, 2
    %vm340 = vcmp.gt.s32.totalorder 0, %v339
    %v341 = vsel %vm340, 0, %v339
    %v342 = vsub.s32 32, %v341
    %v343 = vshll.u32 %v334, %v341
    %v344 = vshrl.u32 %v326, %v342
    %v345 = vor.u32 %v343, %v344
    %v346 = vsub.s32 4294967266, %v341
    %v347 = vadd.s32 %v346, 127
    %v348 = vshll.u32 %v347, 23
    %v349 = vor.u32 4788187, %v348
    %v350 = vand.u32 2147483647, %v349
    %v352 = vcvt.s32.f32 %v345
    %v353 = vmul.f32 %v352, %v350
    %v354 = vxor.u32 %v353, 2147483648
    %v355 = vsel %vm272, %v354, %v353
    %v356 = vsub.s32 4, %v332
    %v357 = vsel %vm272, %v356, %v332
    %v358 = vsel %vm271, %v60, %v355
    %v359 = vsel %vm271, 0, %v357
    %v360 = vcosq.f32.pop %v358
    %v361 = vsinq.f32.pop %v358
    %vm362 = vweird.f32 %v60
    %v363 = vadd.s32 %v359, 3
    %v364 = vand.u32 %v363, 3
    %vm365 = vcmp.lt.s32.totalorder %v364, 2
    %vm366 = vcmp.eq.s32.totalorder %v364, 0
    %v367 = vxor.u32 %v361, 2147483648
    %v368 = vsel %vm366, %v360, %v367
    %vm369 = vcmp.eq.s32.totalorder %v364, 2
    %v370 = vxor.u32 %v360, 2147483648
    %v371 = vsel %vm369, %v370, %v361
    %v372 = vsel %vm365, %v368, %v371
    %v373 = vsel %vm362, nan, %v372
    %v374 = vand.u32 2147483647, %v61
    %vm375 = vcmp.le.f32.partialorder %v374, 0.7853982
    %vm376 = vcmp.lt.s32.totalorder %v61, 0
    %v377 = vand.u32 %v61, 2139095040
    %v378 = vshrl.u32 %v377, 23
    %v379 = vsub.s32 %v378, 127
    %v380 = vand.u32 2147483647, %v61
    %v381 = vand.u32 %v380, 8388607
    %v382 = vor.u32 %v381, 8388608
    %v383 = vsub.s32 0, %v382
    %v384 = vadd.s32 %v379, 1
    %vm385 = vcmp.gt.s32.totalorder %v384, 0
    %v386 = vsel %vm385, %v384, 0
    %v387 = vshrl.u32 %v386, 5
    %v388 = vand.u32 %v386, 31
    %v389 = vsub.s32 32, %v388
    %v390 = vshrl.u32 683565275, %v389
    %v391 = vshll.u32 683565275, %v388
    %v392 = vshrl.u32 2475754826, %v389
    %v393 = vor.u32 %v391, %v392
    %v394 = vshll.u32 2475754826, %v388
    %v395 = vshrl.u32 2131351028, %v389
    %v396 = vor.u32 %v394, %v395
    %v397 = vshll.u32 2131351028, %v388
    %v398 = vshrl.u32 2102212464, %v389
    %v399 = vor.u32 %v397, %v398
    %v400 = vshll.u32 2102212464, %v388
    %v401 = vshrl.u32 920167782, %v389
    %v402 = vor.u32 %v400, %v401
    %v403 = vshll.u32 920167782, %v388
    %v404 = vshrl.u32 1326507024, %v389
    %v405 = vor.u32 %v403, %v404
    %vm406 = vcmp.lt.s32.totalorder %v387, 1
    %vm407 = vcmp.lt.s32.totalorder %v387, 2
    %vm408 = vcmp.lt.s32.totalorder %v387, 3
    %vm409 = vcmp.lt.s32.totalorder %v387, 4
    %v410 = vsel %vm406, %v390, %v393
    %v411 = vsel %vm409, %v399, 2102212464
    %v412 = vsel %vm408, %v396, %v411
    %v413 = vsel %vm407, %v410, %v412
    %v414 = vsel %vm406, %v393, %v396
    %v415 = vsel %vm409, %v402, 920167782
    %v416 = vsel %vm408, %v399, %v415
    %v417 = vsel %vm407, %v414, %v416
    %v418 = vsel %vm406, %v396, %v399
    %v419 = vsel %vm409, %v405, 1326507024
    %v420 = vsel %vm408, %v402, %v419
    %v421 = vsel %vm407, %v418, %v420
    %v422 = vshll.u32 %v382, 8
    %v423 = vmul.u32.u64.compose %v422, %v421
    %v424 = vextract.low.u32 %v423
    %v425 = vextract.high.u32 %v423
    %v426 = vmul.u32.u64.compose %v422, %v417
    %v427 = vextract.low.u32 %v426
    %v428 = vextract.high.u32 %v426
    %v429 = vmul.u32 %v422, %v413
    %v430 = vadd.s32 %v425, %v427
    %vm431 = vc.u32 %v425, %v427
    %v432 = vadd.s32 %v428, 1
    %v433 = vsel %vm431, %v432, %v428
    %v434 = vadd.s32 %v429, %v433
    %v435 = vadd.s32 %v434, 536870912
    %v436 = vshrl.u32 %v435, 30
    %v437 = vshll.u32 %v436, 30
    %v438 = vsub.s32 %v434, %v437
    %vm439 = vcmp.lt.s32.totalorder %v438, 0
    %v440 = vsub.s32 0, %v438
    %v441 = vsel %vm439, %v440, %v438
    %v442 = vclz %v441
    %v443 = vsub.s32 %v442, 2
    %vm444 = vcmp.gt.s32.totalorder 0, %v443
    %v445 = vsel %vm444, 0, %v443
    %v446 = vsub.s32 32, %v445
    %v447 = vshll.u32 %v438, %v445
    %v448 = vshrl.u32 %v430, %v446
    %v449 = vor.u32 %v447, %v448
    %v450 = vsub.s32 4294967266, %v445
    %v451 = vadd.s32 %v450, 127
    %v452 = vshll.u32 %v451, 23
    %v453 = vor.u32 4788187, %v452
    %v454 = vand.u32 2147483647, %v453
    %v456 = vcvt.s32.f32 %v449
    %v457 = vmul.f32 %v456, %v454
    %v458 = vxor.u32 %v457, 2147483648
    %v459 = vsel %vm376, %v458, %v457
    %v460 = vsub.s32 4, %v436
    %v461 = vsel %vm376, %v460, %v436
    %v462 = vsel %vm375, %v61, %v459
    %v463 = vsel %vm375, 0, %v461
    %v464 = vcosq.f32.pop %v462
    %v465 = vsinq.f32.pop %v462
    %vm466 = vweird.f32 %v61
    %v467 = vadd.s32 %v463, 3
    %v468 = vand.u32 %v467, 3
    %vm469 = vcmp.lt.s32.totalorder %v468, 2
    %vm470 = vcmp.eq.s32.totalorder %v468, 0
    %v471 = vxor.u32 %v465, 2147483648
    %v472 = vsel %vm470, %v464, %v471
    %vm473 = vcmp.eq.s32.totalorder %v468, 2
    %v474 = vxor.u32 %v464, 2147483648
    %v475 = vsel %vm473, %v474, %v465
    %v476 = vsel %vm469, %v472, %v475
    %v477 = vsel %vm466, nan, %v476
    %v478 = vld [vmem:[#allocation4] sm:$0xff]
    %v479 = vld [vmem:[#allocation4 + $0x8] sm:$0xff]
    %v480 = vld [vmem:[#allocation4 + $0x10] sm:$0xff]
    %v481 = vld [vmem:[#allocation4 + $0x18] sm:$0xff]
    %v482 = vand.u32 2147483647, %v478
    %vm483 = vcmp.le.f32.partialorder %v482, 0.7853982
    %vm484 = vcmp.lt.s32.totalorder %v478, 0
    %v485 = vand.u32 %v478, 2139095040
    %v486 = vshrl.u32 %v485, 23
    %v487 = vsub.s32 %v486, 127
    %v488 = vand.u32 2147483647, %v478
    %v489 = vand.u32 %v488, 8388607
    %v490 = vor.u32 %v489, 8388608
    %v491 = vsub.s32 0, %v490
    %v492 = vadd.s32 %v487, 1
    %vm493 = vcmp.gt.s32.totalorder %v492, 0
    %v494 = vsel %vm493, %v492, 0
    %v495 = vshrl.u32 %v494, 5
    %v496 = vand.u32 %v494, 31
    %v497 = vsub.s32 32, %v496
    %v498 = vshrl.u32 683565275, %v497
    %v499 = vshll.u32 683565275, %v496
    %v500 = vshrl.u32 2475754826, %v497
    %v501 = vor.u32 %v499, %v500
    %v502 = vshll.u32 2475754826, %v496
    %v503 = vshrl.u32 2131351028, %v497
    %v504 = vor.u32 %v502, %v503
    %v505 = vshll.u32 2131351028, %v496
    %v506 = vshrl.u32 2102212464, %v497
    %v507 = vor.u32 %v505, %v506
    %v508 = vshll.u32 2102212464, %v496
    %v509 = vshrl.u32 920167782, %v497
    %v510 = vor.u32 %v508, %v509
    %v511 = vshll.u32 920167782, %v496
    %v512 = vshrl.u32 1326507024, %v497
    %v513 = vor.u32 %v511, %v512
    %vm514 = vcmp.lt.s32.totalorder %v495, 1
    %vm515 = vcmp.lt.s32.totalorder %v495, 2
    %vm516 = vcmp.lt.s32.totalorder %v495, 3
    %vm517 = vcmp.lt.s32.totalorder %v495, 4
    %v518 = vsel %vm514, %v498, %v501
    %v519 = vsel %vm517, %v507, 2102212464
    %v520 = vsel %vm516, %v504, %v519
    %v521 = vsel %vm515, %v518, %v520
    %v522 = vsel %vm514, %v501, %v504
    %v523 = vsel %vm517, %v510, 920167782
    %v524 = vsel %vm516, %v507, %v523
    %v525 = vsel %vm515, %v522, %v524
    %v526 = vsel %vm514, %v504, %v507
    %v527 = vsel %vm517, %v513, 1326507024
    %v528 = vsel %vm516, %v510, %v527
    %v529 = vsel %vm515, %v526, %v528
    %v530 = vshll.u32 %v490, 8
    %v531 = vmul.u32.u64.compose %v530, %v529
    %v532 = vextract.low.u32 %v531
    %v533 = vextract.high.u32 %v531
    %v534 = vmul.u32.u64.compose %v530, %v525
    %v535 = vextract.low.u32 %v534
    %v536 = vextract.high.u32 %v534
    %v537 = vmul.u32 %v530, %v521
    %v538 = vadd.s32 %v533, %v535
    %vm539 = vc.u32 %v533, %v535
    %v540 = vadd.s32 %v536, 1
    %v541 = vsel %vm539, %v540, %v536
    %v542 = vadd.s32 %v537, %v541
    %v543 = vadd.s32 %v542, 536870912
    %v544 = vshrl.u32 %v543, 30
    %v545 = vshll.u32 %v544, 30
    %v546 = vsub.s32 %v542, %v545
    %vm547 = vcmp.lt.s32.totalorder %v546, 0
    %v548 = vsub.s32 0, %v546
    %v549 = vsel %vm547, %v548, %v546
    %v550 = vclz %v549
    %v551 = vsub.s32 %v550, 2
    %vm552 = vcmp.gt.s32.totalorder 0, %v551
    %v553 = vsel %vm552, 0, %v551
    %v554 = vsub.s32 32, %v553
    %v555 = vshll.u32 %v546, %v553
    %v556 = vshrl.u32 %v538, %v554
    %v557 = vor.u32 %v555, %v556
    %v558 = vsub.s32 4294967266, %v553
    %v559 = vadd.s32 %v558, 127
    %v560 = vshll.u32 %v559, 23
    %v561 = vor.u32 4788187, %v560
    %v562 = vand.u32 2147483647, %v561
    %v564 = vcvt.s32.f32 %v557
    %v565 = vmul.f32 %v564, %v562
    %v566 = vxor.u32 %v565, 2147483648
    %v567 = vsel %vm484, %v566, %v565
    %v568 = vsub.s32 4, %v544
    %v569 = vsel %vm484, %v568, %v544
    %v570 = vsel %vm483, %v478, %v567
    %v571 = vsel %vm483, 0, %v569
    %v572 = vcosq.f32.pop %v570
    %v573 = vsinq.f32.pop %v570
    %vm574 = vweird.f32 %v478
    %v575 = vand.u32 %v571, 3
    %vm576 = vcmp.lt.s32.totalorder %v575, 2
    %vm577 = vcmp.eq.s32.totalorder %v575, 0
    %v578 = vxor.u32 %v573, 2147483648
    %v579 = vsel %vm577, %v572, %v578
    %vm580 = vcmp.eq.s32.totalorder %v575, 2
    %v581 = vxor.u32 %v572, 2147483648
    %v582 = vsel %vm580, %v581, %v573
    %v583 = vsel %vm576, %v579, %v582
    %v584 = vsel %vm574, nan, %v583
    %v585 = vand.u32 2147483647, %v479
    %vm586 = vcmp.le.f32.partialorder %v585, 0.7853982
    %vm587 = vcmp.lt.s32.totalorder %v479, 0
    %v588 = vand.u32 %v479, 2139095040
    %v589 = vshrl.u32 %v588, 23
    %v590 = vsub.s32 %v589, 127
    %v591 = vand.u32 2147483647, %v479
    %v592 = vand.u32 %v591, 8388607
    %v593 = vor.u32 %v592, 8388608
    %v594 = vsub.s32 0, %v593
    %v595 = vadd.s32 %v590, 1
    %vm596 = vcmp.gt.s32.totalorder %v595, 0
    %v597 = vsel %vm596, %v595, 0
    %v598 = vshrl.u32 %v597, 5
    %v599 = vand.u32 %v597, 31
    %v600 = vsub.s32 32, %v599
    %v601 = vshrl.u32 683565275, %v600
    %v602 = vshll.u32 683565275, %v599
    %v603 = vshrl.u32 2475754826, %v600
    %v604 = vor.u32 %v602, %v603
    %v605 = vshll.u32 2475754826, %v599
    %v606 = vshrl.u32 2131351028, %v600
    %v607 = vor.u32 %v605, %v606
    %v608 = vshll.u32 2131351028, %v599
    %v609 = vshrl.u32 2102212464, %v600
    %v610 = vor.u32 %v608, %v609
    %v611 = vshll.u32 2102212464, %v599
    %v612 = vshrl.u32 920167782, %v600
    %v613 = vor.u32 %v611, %v612
    %v614 = vshll.u32 920167782, %v599
    %v615 = vshrl.u32 1326507024, %v600
    %v616 = vor.u32 %v614, %v615
    %vm617 = vcmp.lt.s32.totalorder %v598, 1
    %vm618 = vcmp.lt.s32.totalorder %v598, 2
    %vm619 = vcmp.lt.s32.totalorder %v598, 3
    %vm620 = vcmp.lt.s32.totalorder %v598, 4
    %v621 = vsel %vm617, %v601, %v604
    %v622 = vsel %vm620, %v610, 2102212464
    %v623 = vsel %vm619, %v607, %v622
    %v624 = vsel %vm618, %v621, %v623
    %v625 = vsel %vm617, %v604, %v607
    %v626 = vsel %vm620, %v613, 920167782
    %v627 = vsel %vm619, %v610, %v626
    %v628 = vsel %vm618, %v625, %v627
    %v629 = vsel %vm617, %v607, %v610
    %v630 = vsel %vm620, %v616, 1326507024
    %v631 = vsel %vm619, %v613, %v630
    %v632 = vsel %vm618, %v629, %v631
    %v633 = vshll.u32 %v593, 8
    %v634 = vmul.u32.u64.compose %v633, %v632
    %v635 = vextract.low.u32 %v634
    %v636 = vextract.high.u32 %v634
    %v637 = vmul.u32.u64.compose %v633, %v628
    %v638 = vextract.low.u32 %v637
    %v639 = vextract.high.u32 %v637
    %v640 = vmul.u32 %v633, %v624
    %v641 = vadd.s32 %v636, %v638
    %vm642 = vc.u32 %v636, %v638
    %v643 = vadd.s32 %v639, 1
    %v644 = vsel %vm642, %v643, %v639
    %v645 = vadd.s32 %v640, %v644
    %v646 = vadd.s32 %v645, 536870912
    %v647 = vshrl.u32 %v646, 30
    %v648 = vshll.u32 %v647, 30
    %v649 = vsub.s32 %v645, %v648
    %vm650 = vcmp.lt.s32.totalorder %v649, 0
    %v651 = vsub.s32 0, %v649
    %v652 = vsel %vm650, %v651, %v649
    %v653 = vclz %v652
    %v654 = vsub.s32 %v653, 2
    %vm655 = vcmp.gt.s32.totalorder 0, %v654
    %v656 = vsel %vm655, 0, %v654
    %v657 = vsub.s32 32, %v656
    %v658 = vshll.u32 %v649, %v656
    %v659 = vshrl.u32 %v641, %v657
    %v660 = vor.u32 %v658, %v659
    %v661 = vsub.s32 4294967266, %v656
    %v662 = vadd.s32 %v661, 127
    %v663 = vshll.u32 %v662, 23
    %v664 = vor.u32 4788187, %v663
    %v665 = vand.u32 2147483647, %v664
    %v667 = vcvt.s32.f32 %v660
    %v668 = vmul.f32 %v667, %v665
    %v669 = vxor.u32 %v668, 2147483648
    %v670 = vsel %vm587, %v669, %v668
    %v671 = vsub.s32 4, %v647
    %v672 = vsel %vm587, %v671, %v647
    %v673 = vsel %vm586, %v479, %v670
    %v674 = vsel %vm586, 0, %v672
    %v675 = vcosq.f32.pop %v673
    %v676 = vsinq.f32.pop %v673
    %vm677 = vweird.f32 %v479
    %v678 = vand.u32 %v674, 3
    %vm679 = vcmp.lt.s32.totalorder %v678, 2
    %vm680 = vcmp.eq.s32.totalorder %v678, 0
    %v681 = vxor.u32 %v676, 2147483648
    %v682 = vsel %vm680, %v675, %v681
    %vm683 = vcmp.eq.s32.totalorder %v678, 2
    %v684 = vxor.u32 %v675, 2147483648
    %v685 = vsel %vm683, %v684, %v676
    %v686 = vsel %vm679, %v682, %v685
    %v687 = vsel %vm677, nan, %v686
    %v688 = vand.u32 2147483647, %v480
    %vm689 = vcmp.le.f32.partialorder %v688, 0.7853982
    %vm690 = vcmp.lt.s32.totalorder %v480, 0
    %v691 = vand.u32 %v480, 2139095040
    %v692 = vshrl.u32 %v691, 23
    %v693 = vsub.s32 %v692, 127
    %v694 = vand.u32 2147483647, %v480
    %v695 = vand.u32 %v694, 8388607
    %v696 = vor.u32 %v695, 8388608
    %v697 = vsub.s32 0, %v696
    %v698 = vadd.s32 %v693, 1
    %vm699 = vcmp.gt.s32.totalorder %v698, 0
    %v700 = vsel %vm699, %v698, 0
    %v701 = vshrl.u32 %v700, 5
    %v702 = vand.u32 %v700, 31
    %v703 = vsub.s32 32, %v702
    %v704 = vshrl.u32 683565275, %v703
    %v705 = vshll.u32 683565275, %v702
    %v706 = vshrl.u32 2475754826, %v703
    %v707 = vor.u32 %v705, %v706
    %v708 = vshll.u32 2475754826, %v702
    %v709 = vshrl.u32 2131351028, %v703
    %v710 = vor.u32 %v708, %v709
    %v711 = vshll.u32 2131351028, %v702
    %v712 = vshrl.u32 2102212464, %v703
    %v713 = vor.u32 %v711, %v712
    %v714 = vshll.u32 2102212464, %v702
    %v715 = vshrl.u32 920167782, %v703
    %v716 = vor.u32 %v714, %v715
    %v717 = vshll.u32 920167782, %v702
    %v718 = vshrl.u32 1326507024, %v703
    %v719 = vor.u32 %v717, %v718
    %vm720 = vcmp.lt.s32.totalorder %v701, 1
    %vm721 = vcmp.lt.s32.totalorder %v701, 2
    %vm722 = vcmp.lt.s32.totalorder %v701, 3
    %vm723 = vcmp.lt.s32.totalorder %v701, 4
    %v724 = vsel %vm720, %v704, %v707
    %v725 = vsel %vm723, %v713, 2102212464
    %v726 = vsel %vm722, %v710, %v725
    %v727 = vsel %vm721, %v724, %v726
    %v728 = vsel %vm720, %v707, %v710
    %v729 = vsel %vm723, %v716, 920167782
    %v730 = vsel %vm722, %v713, %v729
    %v731 = vsel %vm721, %v728, %v730
    %v732 = vsel %vm720, %v710, %v713
    %v733 = vsel %vm723, %v719, 1326507024
    %v734 = vsel %vm722, %v716, %v733
    %v735 = vsel %vm721, %v732, %v734
    %v736 = vshll.u32 %v696, 8
    %v737 = vmul.u32.u64.compose %v736, %v735
    %v738 = vextract.low.u32 %v737
    %v739 = vextract.high.u32 %v737
    %v740 = vmul.u32.u64.compose %v736, %v731
    %v741 = vextract.low.u32 %v740
    %v742 = vextract.high.u32 %v740
    %v743 = vmul.u32 %v736, %v727
    %v744 = vadd.s32 %v739, %v741
    %vm745 = vc.u32 %v739, %v741
    %v746 = vadd.s32 %v742, 1
    %v747 = vsel %vm745, %v746, %v742
    %v748 = vadd.s32 %v743, %v747
    %v749 = vadd.s32 %v748, 536870912
    %v750 = vshrl.u32 %v749, 30
    %v751 = vshll.u32 %v750, 30
    %v752 = vsub.s32 %v748, %v751
    %vm753 = vcmp.lt.s32.totalorder %v752, 0
    %v754 = vsub.s32 0, %v752
    %v755 = vsel %vm753, %v754, %v752
    %v756 = vclz %v755
    %v757 = vsub.s32 %v756, 2
    %vm758 = vcmp.gt.s32.totalorder 0, %v757
    %v759 = vsel %vm758, 0, %v757
    %v760 = vsub.s32 32, %v759
    %v761 = vshll.u32 %v752, %v759
    %v762 = vshrl.u32 %v744, %v760
    %v763 = vor.u32 %v761, %v762
    %v764 = vsub.s32 4294967266, %v759
    %v765 = vadd.s32 %v764, 127
    %v766 = vshll.u32 %v765, 23
    %v767 = vor.u32 4788187, %v766
    %v768 = vand.u32 2147483647, %v767
    %v770 = vcvt.s32.f32 %v763
    %v771 = vmul.f32 %v770, %v768
    %v772 = vxor.u32 %v771, 2147483648
    %v773 = vsel %vm690, %v772, %v771
    %v774 = vsub.s32 4, %v750
    %v775 = vsel %vm690, %v774, %v750
    %v776 = vsel %vm689, %v480, %v773
    %v777 = vsel %vm689, 0, %v775
    %v778 = vcosq.f32.pop %v776
    %v779 = vsinq.f32.pop %v776
    %vm780 = vweird.f32 %v480
    %v781 = vand.u32 %v777, 3
    %vm782 = vcmp.lt.s32.totalorder %v781, 2
    %vm783 = vcmp.eq.s32.totalorder %v781, 0
    %v784 = vxor.u32 %v779, 2147483648
    %v785 = vsel %vm783, %v778, %v784
    %vm786 = vcmp.eq.s32.totalorder %v781, 2
    %v787 = vxor.u32 %v778, 2147483648
    %v788 = vsel %vm786, %v787, %v779
    %v789 = vsel %vm782, %v785, %v788
    %v790 = vsel %vm780, nan, %v789
    %v791 = vand.u32 2147483647, %v481
    %vm792 = vcmp.le.f32.partialorder %v791, 0.7853982
    %vm793 = vcmp.lt.s32.totalorder %v481, 0
    %v794 = vand.u32 %v481, 2139095040
    %v795 = vshrl.u32 %v794, 23
    %v796 = vsub.s32 %v795, 127
    %v797 = vand.u32 2147483647, %v481
    %v798 = vand.u32 %v797, 8388607
    %v799 = vor.u32 %v798, 8388608
    %v800 = vsub.s32 0, %v799
    %v801 = vadd.s32 %v796, 1
    %vm802 = vcmp.gt.s32.totalorder %v801, 0
    %v803 = vsel %vm802, %v801, 0
    %v804 = vshrl.u32 %v803, 5
    %v805 = vand.u32 %v803, 31
    %v806 = vsub.s32 32, %v805
    %v807 = vshrl.u32 683565275, %v806
    %v808 = vshll.u32 683565275, %v805
    %v809 = vshrl.u32 2475754826, %v806
    %v810 = vor.u32 %v808, %v809
    %v811 = vshll.u32 2475754826, %v805
    %v812 = vshrl.u32 2131351028, %v806
    %v813 = vor.u32 %v811, %v812
    %v814 = vshll.u32 2131351028, %v805
    %v815 = vshrl.u32 2102212464, %v806
    %v816 = vor.u32 %v814, %v815
    %v817 = vshll.u32 2102212464, %v805
    %v818 = vshrl.u32 920167782, %v806
    %v819 = vor.u32 %v817, %v818
    %v820 = vshll.u32 920167782, %v805
    %v821 = vshrl.u32 1326507024, %v806
    %v822 = vor.u32 %v820, %v821
    %vm823 = vcmp.lt.s32.totalorder %v804, 1
    %vm824 = vcmp.lt.s32.totalorder %v804, 2
    %vm825 = vcmp.lt.s32.totalorder %v804, 3
    %vm826 = vcmp.lt.s32.totalorder %v804, 4
    %v827 = vsel %vm823, %v807, %v810
    %v828 = vsel %vm826, %v816, 2102212464
    %v829 = vsel %vm825, %v813, %v828
    %v830 = vsel %vm824, %v827, %v829
    %v831 = vsel %vm823, %v810, %v813
    %v832 = vsel %vm826, %v819, 920167782
    %v833 = vsel %vm825, %v816, %v832
    %v834 = vsel %vm824, %v831, %v833
    %v835 = vsel %vm823, %v813, %v816
    %v836 = vsel %vm826, %v822, 1326507024
    %v837 = vsel %vm825, %v819, %v836
    %v838 = vsel %vm824, %v835, %v837
    %v839 = vshll.u32 %v799, 8
    %v840 = vmul.u32.u64.compose %v839, %v838
    %v841 = vextract.low.u32 %v840
    %v842 = vextract.high.u32 %v840
    %v843 = vmul.u32.u64.compose %v839, %v834
    %v844 = vextract.low.u32 %v843
    %v845 = vextract.high.u32 %v843
    %v846 = vmul.u32 %v839, %v830
    %v847 = vadd.s32 %v842, %v844
    %vm848 = vc.u32 %v842, %v844
    %v849 = vadd.s32 %v845, 1
    %v850 = vsel %vm848, %v849, %v845
    %v851 = vadd.s32 %v846, %v850
    %v852 = vadd.s32 %v851, 536870912
    %v853 = vshrl.u32 %v852, 30
    %v854 = vshll.u32 %v853, 30
    %v855 = vsub.s32 %v851, %v854
    %vm856 = vcmp.lt.s32.totalorder %v855, 0
    %v857 = vsub.s32 0, %v855
    %v858 = vsel %vm856, %v857, %v855
    %v859 = vclz %v858
    %v860 = vsub.s32 %v859, 2
    %vm861 = vcmp.gt.s32.totalorder 0, %v860
    %v862 = vsel %vm861, 0, %v860
    %v863 = vsub.s32 32, %v862
    %v864 = vshll.u32 %v855, %v862
    %v865 = vshrl.u32 %v847, %v863
    %v866 = vor.u32 %v864, %v865
    %v867 = vsub.s32 4294967266, %v862
    %v868 = vadd.s32 %v867, 127
    %v869 = vshll.u32 %v868, 23
    %v870 = vor.u32 4788187, %v869
    %v871 = vand.u32 2147483647, %v870
    %v873 = vcvt.s32.f32 %v866
    %v874 = vmul.f32 %v873, %v871
    %v875 = vxor.u32 %v874, 2147483648
    %v876 = vsel %vm793, %v875, %v874
    %v877 = vsub.s32 4, %v853
    %v878 = vsel %vm793, %v877, %v853
    %v879 = vsel %vm792, %v481, %v876
    %v880 = vsel %vm792, 0, %v878
    %v881 = vcosq.f32.pop %v879
    %v882 = vsinq.f32.pop %v879
    %vm883 = vweird.f32 %v481
    %v884 = vand.u32 %v880, 3
    %vm885 = vcmp.lt.s32.totalorder %v884, 2
    %vm886 = vcmp.eq.s32.totalorder %v884, 0
    %v887 = vxor.u32 %v882, 2147483648
    %v888 = vsel %vm886, %v881, %v887
    %vm889 = vcmp.eq.s32.totalorder %v884, 2
    %v890 = vxor.u32 %v881, 2147483648
    %v891 = vsel %vm889, %v890, %v882
    %v892 = vsel %vm885, %v888, %v891
    %v893 = vsel %vm883, nan, %v892
    %v894 = vadd.f32 %v165, %v584
    %v895 = vadd.f32 %v269, %v687
    %v896 = vadd.f32 %v373, %v790
    %v897 = vadd.f32 %v477, %v893
    %v898 = vld [vmem:[#allocation6] sm:$0xff]
    %v899 = vld [vmem:[#allocation6 + $0x8] sm:$0xff]
    %v900 = vld [vmem:[#allocation6 + $0x10] sm:$0xff]
    %v901 = vld [vmem:[#allocation6 + $0x18] sm:$0xff]
    %v902 = vld [vmem:[#allocation6 + $0x20] sm:$0xff]
    %v903 = vld [vmem:[#allocation6 + $0x28] sm:$0xff]
    %v904 = vld [vmem:[#allocation6 + $0x30] sm:$0xff]
    %v905 = vld [vmem:[#allocation6 + $0x38] sm:$0xff]
    %v906 = vld [vmem:[%s3] sm:$0x1]
    %v908 = vlaneseq
    %v909 = vshrl.u32 %v908, 7
    %v910 = vsub.s32 0, %v909
    %v911 = vrot.slane %v906, %v910
    %vm913 = vcmask 523264
    %v915 = vsel %vm913, %v894, 0
    %v918 = vsel %vm913, %v895, 0
    %v921 = vsel %vm913, %v896, 0
    %v924 = vsel %vm913, %v897, 0
    %926 = vmatprep.subr.mxu0 0.0
    %927 = vmatpush1.msra.mxu0 0.0
    %928 = vmatprep.subr.mxu0 0.0
    %929 = vmatpush1.msra.mxu0 0.0
    %930 = vmatprep.subr.mxu0 0.0
    %931 = vmatpush1.msra.mxu0 0.0
    %932 = vmatprep.subr.mxu0 0.0
    %933 = vmatpush1.msra.mxu0 0.0
    %934 = vmatprep.subr.mxu0 0.0
    %935 = vmatpush1.msra.mxu0 0.0
    %936 = vmatprep.subr.mxu0 0.0
    %937 = vmatpush1.msra.mxu0 0.0
    %938 = vmatprep.subr.mxu0 0.0
    %939 = vmatpush1.msra.mxu0 0.0
    %940 = vmatprep.subr.mxu0 0.0
    %941 = vmatpush1.msra.mxu0 0.0
    %942 = vmatprep.subr.mxu0 0.0
    %943 = vmatpush1.msra.mxu0 %v905
    %944 = vmatprep.subr.mxu0 0.0
    %945 = vmatpush1.msra.mxu0 %v904
    %946 = vmatprep.subr.mxu0 0.0
    %947 = vmatpush1.msra.mxu0 %v903
    %948 = vmatprep.subr.mxu0 0.0
    %949 = vmatpush1.msra.mxu0 %v902
    %950 = vmatprep.subr.mxu0 0.0
    %951 = vmatpush1.msra.mxu0 %v901
    %952 = vmatprep.subr.mxu0 0.0
    %953 = vmatpush1.msra.mxu0 %v900
    %954 = vmatprep.subr.mxu0 0.0
    %955 = vmatpush1.msra.mxu0 %v899
    %956 = vmatprep.subr.mxu0 0.0
    %957 = vmatpush1.msra.mxu0 %v898
    %958 = vmatprep.subr.mxu0 0.0
    %959 = vmatpush2.msra.mxu0 0.0
    %960 = vmatprep.subr.mxu0 0.0
    %961 = vmatpush2.msra.mxu0 0.0
    %962 = vmatprep.subr.mxu0 0.0
    %963 = vmatpush2.msra.mxu0 0.0
    %964 = vmatprep.subr.mxu0 0.0
    %965 = vmatpush2.msra.mxu0 0.0
    %966 = vmatprep.subr.mxu0 0.0
    %967 = vmatpush2.msra.mxu0 0.0
    %968 = vmatprep.subr.mxu0 0.0
    %969 = vmatpush2.msra.mxu0 0.0
    %970 = vmatprep.subr.mxu0 0.0
    %971 = vmatpush2.msra.mxu0 0.0
    %972 = vmatprep.subr.mxu0 0.0
    %973 = vmatpush2.msra.mxu0 0.0
    %974 = vmatprep.subr.mxu0 0.0
    %975 = vmatpush2.msra.mxu0 0.0
    %976 = vmatprep.subr.mxu0 0.0
    %977 = vmatpush2.msra.mxu0 0.0
    %978 = vmatprep.subr.mxu0 0.0
    %979 = vmatpush2.msra.mxu0 0.0
    %980 = vmatprep.subr.mxu0 0.0
    %981 = vmatpush2.msra.mxu0 0.0
    %982 = vmatprep.subr.mxu0 0.0
    %983 = vmatpush2.msra.mxu0 0.0
    %984 = vmatprep.subr.mxu0 0.0
    %985 = vmatpush2.msra.mxu0 0.0
    %986 = vmatprep.subr.mxu0 0.0
    %987 = vmatpush2.msra.mxu0 0.0
    %988 = vmatprep.subr.mxu0 0.0
    %989 = vmatpush2.msra.mxu0 0.0
    %990 = vmatprep.mubr.f32.mxu0 0.0
    %991 = vmatmul.mubr.f32.gmra.mxu0 %v915
    %v992 = vpop.f32.mrf.mxu0
    %v993 = vadd.f32 %v911, %v992
    %v994 = vpop.f32.mrf.mxu0
    %995 = vmatprep.mubr.f32.mxu0 0.0
    %996 = vmatmul.mubr.f32.gmra.mxu0 %v918
    %v997 = vpop.f32.mrf.mxu0
    %v998 = vadd.f32 %v911, %v997
    %v999 = vpop.f32.mrf.mxu0
    %1000 = vmatprep.mubr.f32.mxu0 0.0
    %1001 = vmatmul.mubr.f32.gmra.mxu0 %v921
    %v1002 = vpop.f32.mrf.mxu0
    %v1003 = vadd.f32 %v911, %v1002
    %v1004 = vpop.f32.mrf.mxu0
    %1005 = vmatprep.mubr.f32.mxu0 0.0
    %1006 = vmatmul.mubr.f32.gmra.mxu0 %v924
    %v1007 = vpop.f32.mrf.mxu0
    %v1008 = vadd.f32 %v911, %v1007
    %v1009 = vpop.f32.mrf.mxu0
    %1010 = vdwg.mxu0
    %1011 = vst [vmem:[%s4] sm:$0xff] %v993
    %1012 = vst [vmem:[%s4 + $0x8] sm:$0xff] %v998
    %1013 = vst [vmem:[%s4 + $0x10] sm:$0xff] %v1003
    %1014 = vst [vmem:[%s4 + $0x18] sm:$0xff] %v1008
    // Predicated region
    $region30: #{net_forward.1} parent=1 // pred_check
      _
    $region31: #{net_forward.1} parent=1 // pred_check_branch
      %1016 = sbr.rel (0) target = $region33
    $region32: #{net_forward.1} parent=1 // pred_region
      _
    $region33: #{net_forward.1} parent=1 // pred_fallthru
      _
    // Predicated region
    $region34: #{net_forward.1} parent=1 // pred_check
      _
    $region35: #{net_forward.1} parent=1 // pred_check_branch
      %1018 = sbr.rel (0) target = $region37
    $region36: #{net_forward.1} parent=1 // pred_region
      _
    $region37: #{net_forward.1} parent=1 // pred_fallthru
      _
    %1019 = vsyncpa [#allocation3], 1
    %1020 = vsyncpa [#allocation5], 1

</llo_original>
